<compile_context>
chip_gen: v7x
topology: tpu7x:2x2x1
jax: 0.10.0
libtpu: 0.0.40
codegen_flags: <defaults>
</compile_context>

<pallas_src>
import jax
import jax.numpy as jnp
from jax.experimental import pallas as pl
from jax.experimental.pallas import tpu as pltpu

_SUBLANE = 8


def _round_up(x, m):
    return ((x + m - 1) // m) * m


def trigger_generator_kernel(x_ref, w1_ref, b1_ref, wf_ref, bf_ref,
                             we_ref, be_ref, feat_ref, edge_ref):
    # Hidden layer: h = x @ W1 + b1   (matches Linear(input_dim, hidden_dim))
    h = jnp.dot(x_ref[...], w1_ref[...],
                preferred_element_type=jnp.float32) + b1_ref[...]
    # Two heads, stored directly to their own outputs (no padded slab, no
    # post-kernel slice pass).
    feat = jnp.dot(h, wf_ref[...], preferred_element_type=jnp.float32) + bf_ref[...]
    edge = jnp.dot(h, we_ref[...], preferred_element_type=jnp.float32) + be_ref[...]
    feat_ref[...] = feat.astype(feat_ref.dtype)
    edge_ref[...] = edge.astype(edge_ref.dtype)


def trigger_generator_forward(x, w1, b1, wf, bf, we, be, *, tm=8192,
                              out_dtype=None):
    """x: [N, D]; w1: [D, H]; b1: [1, H]; wf: [H, F]; bf: [1, F];
    we: [H, E]; be: [1, E]  ->  (feat [N, F], edge [N, E])."""
    N, D = x.shape
    H = w1.shape[1]
    F = wf.shape[1]
    E = we.shape[1]
    out_dtype = x.dtype if out_dtype is None else out_dtype

    # Row tile: biggest sublane-aligned tile up to `tm`; no padded copy of x.
    # The final partial block (if any) is handled by Pallas' block masking.
    tm_eff = min(tm, _round_up(N, _SUBLANE))
    grid = (pl.cdiv(N, tm_eff),)

    feat, edge = pl.pallas_call(
        trigger_generator_kernel,
        out_shape=(jax.ShapeDtypeStruct((N, F), out_dtype),
                   jax.ShapeDtypeStruct((N, E), out_dtype)),
        grid=grid,
        in_specs=[
            pl.BlockSpec((tm_eff, D), lambda i: (i, 0)),   # x: streamed rows
            pl.BlockSpec((D, H), lambda i: (0, 0)),        # W1: resident
            pl.BlockSpec((1, H), lambda i: (0, 0)),        # b1: resident
            pl.BlockSpec((H, F), lambda i: (0, 0)),        # Wf: resident
            pl.BlockSpec((1, F), lambda i: (0, 0)),        # bf: resident
            pl.BlockSpec((H, E), lambda i: (0, 0)),        # We: resident
            pl.BlockSpec((1, E), lambda i: (0, 0)),        # be: resident
        ],
        out_specs=(
            pl.BlockSpec((tm_eff, F), lambda i: (i, 0)),   # feat
            pl.BlockSpec((tm_eff, E), lambda i: (i, 0)),   # edge
        ),
        compiler_params=pltpu.CompilerParams(
            dimension_semantics=("parallel",),
        ),
    )(x, w1, b1, wf, bf, we, be)
    return feat, edge


def _init_linear(key, fan_in, fan_out, dtype=jnp.float32):
    """Deterministic synthetic init (PyTorch-style uniform bound); weight
    stored as [in, out] (transposed vs. torch's [out, in])."""
    kw, kb = jax.random.split(key)
    bound = 1.0 / jnp.sqrt(float(fan_in))
    w = jax.random.uniform(kw, (fan_in, fan_out), dtype, -bound, bound)
    b = jax.random.uniform(kb, (1, fan_out), dtype, -bound, bound)
    return w, b


if __name__ == "__main__":
    # Small shapes consistent with the module defaults.
    N = 8                                                # number of input nodes
    input_dim = 16
    tg_size = 4
    hidden_dim = 32
    feat_dim = tg_size * input_dim                       # 64
    edge_dim = int(tg_size * (tg_size - 1) / 2)          # 6

    key = jax.random.PRNGKey(0)
    kx, kx2, k1, k2, k3 = jax.random.split(key, 5)

    x = jax.random.normal(kx, (N, input_dim), jnp.float32)
    w1, b1 = _init_linear(k1, input_dim, hidden_dim)
    wf, bf = _init_linear(k2, hidden_dim, feat_dim)
    we, be = _init_linear(k3, hidden_dim, edge_dim)

    feat, edge = trigger_generator_forward(x, w1, b1, wf, bf, we, be)
    jax.block_until_ready((feat, edge))

    # Pure-JAX reference check of the same forward semantics.
    h_ref = x @ w1 + b1
    feat_ref = h_ref @ wf + bf
    edge_ref = h_ref @ we + be
    assert feat.shape == (N, feat_dim) and edge.shape == (N, edge_dim)
    assert jnp.allclose(feat, feat_ref, atol=1e-5, rtol=1e-5)
    assert jnp.allclose(edge, edge_ref, atol=1e-5, rtol=1e-5)

    # Exercise the multi-block grid + partial tail block (no x-pad copy path).
    N2 = 200
    x2 = jax.random.normal(kx2, (N2, input_dim), jnp.float32)
    feat2, edge2 = trigger_generator_forward(x2, w1, b1, wf, bf, we, be, tm=64)
    jax.block_until_ready((feat2, edge2))
    h2_ref = x2 @ w1 + b1
    assert feat2.shape == (N2, feat_dim) and edge2.shape == (N2, edge_dim)
    assert jnp.allclose(feat2, h2_ref @ wf + bf, atol=1e-5, rtol=1e-5)
    assert jnp.allclose(edge2, h2_ref @ we + be, atol=1e-5, rtol=1e-5)

    print("KERNEL_OK")
</pallas_src>

<mosaic_0001>
module attributes {stable_mosaic.version = 11 : i64} {
  func.func @trigger_generator_kernel(%arg0: i32, %arg1: memref<8x16xf32, #tpu.memory_space<vmem>>, %arg2: memref<16x32xf32, #tpu.memory_space<vmem>>, %arg3: memref<1x32xf32, #tpu.memory_space<vmem>>, %arg4: memref<32x64xf32, #tpu.memory_space<vmem>>, %arg5: memref<1x64xf32, #tpu.memory_space<vmem>>, %arg6: memref<32x6xf32, #tpu.memory_space<vmem>>, %arg7: memref<1x6xf32, #tpu.memory_space<vmem>>, %arg8: memref<8x64xf32, #tpu.memory_space<vmem>>, %arg9: memref<8x6xf32, #tpu.memory_space<vmem>>) attributes {dimension_semantics = [#tpu.dimension_semantics<parallel>], iteration_bounds = array<i64: 1>, scalar_prefetch = 0 : i64, scratch_operands = 0 : i64, tpu.core_type = #tpu.core_type<tc>, window_params = [{transform_indices = @transform_0, window_bounds = array<i64: 8, 16>}, {pipeline_mode = #tpu.pipeline_mode<synchronous>, transform_indices = @transform_1, window_bounds = array<i64: 16, 32>}, {pipeline_mode = #tpu.pipeline_mode<synchronous>, transform_indices = @transform_2, window_bounds = array<i64: 1, 32>}, {pipeline_mode = #tpu.pipeline_mode<synchronous>, transform_indices = @transform_3, window_bounds = array<i64: 32, 64>}, {pipeline_mode = #tpu.pipeline_mode<synchronous>, transform_indices = @transform_4, window_bounds = array<i64: 1, 64>}, {pipeline_mode = #tpu.pipeline_mode<synchronous>, transform_indices = @transform_5, window_bounds = array<i64: 32, 6>}, {pipeline_mode = #tpu.pipeline_mode<synchronous>, transform_indices = @transform_6, window_bounds = array<i64: 1, 6>}, {transform_indices = @transform_7, window_bounds = array<i64: 8, 64>}, {transform_indices = @transform_8, window_bounds = array<i64: 8, 6>}]} {
    %c0 = arith.constant 0 : index
    %c0_0 = arith.constant 0 : index
    %0 = vector.load %arg1[%c0, %c0_0] : memref<8x16xf32, #tpu.memory_space<vmem>>, vector<8x16xf32>
    %c0_1 = arith.constant 0 : index
    %c0_2 = arith.constant 0 : index
    %1 = vector.load %arg2[%c0_1, %c0_2] : memref<16x32xf32, #tpu.memory_space<vmem>>, vector<16x32xf32>
    %cst = arith.constant dense<0.000000e+00> : vector<8x32xf32>
    %2 = tpu.matmul %0, %1, %cst {dimension_numbers = #tpu.dot_dimension_numbers<[1], [0], [0], [1], [0, 0, 1, 1], [], []>} : vector<8x16xf32>, vector<16x32xf32>, vector<8x32xf32> -> vector<8x32xf32>
    %c0_3 = arith.constant 0 : index
    %c0_4 = arith.constant 0 : index
    %3 = vector.load %arg3[%c0_3, %c0_4] : memref<1x32xf32, #tpu.memory_space<vmem>>, vector<1x32xf32>
    %4 = vector.broadcast %3 : vector<1x32xf32> to vector<8x32xf32>
    %5 = arith.addf %2, %4 : vector<8x32xf32>
    %c0_5 = arith.constant 0 : index
    %c0_6 = arith.constant 0 : index
    %6 = vector.load %arg4[%c0_5, %c0_6] : memref<32x64xf32, #tpu.memory_space<vmem>>, vector<32x64xf32>
    %cst_7 = arith.constant dense<0.000000e+00> : vector<8x64xf32>
    %7 = tpu.matmul %5, %6, %cst_7 {dimension_numbers = #tpu.dot_dimension_numbers<[1], [0], [0], [1], [0, 0, 1, 1], [], []>} : vector<8x32xf32>, vector<32x64xf32>, vector<8x64xf32> -> vector<8x64xf32>
    %c0_8 = arith.constant 0 : index
    %c0_9 = arith.constant 0 : index
    %8 = vector.load %arg5[%c0_8, %c0_9] : memref<1x64xf32, #tpu.memory_space<vmem>>, vector<1x64xf32>
    %9 = vector.broadcast %8 : vector<1x64xf32> to vector<8x64xf32>
    %10 = arith.addf %7, %9 : vector<8x64xf32>
    %c0_10 = arith.constant 0 : index
    %c0_11 = arith.constant 0 : index
    %11 = vector.load %arg6[%c0_10, %c0_11] : memref<32x6xf32, #tpu.memory_space<vmem>>, vector<32x6xf32>
    %cst_12 = arith.constant dense<0.000000e+00> : vector<8x6xf32>
    %12 = tpu.matmul %5, %11, %cst_12 {dimension_numbers = #tpu.dot_dimension_numbers<[1], [0], [0], [1], [0, 0, 1, 1], [], []>} : vector<8x32xf32>, vector<32x6xf32>, vector<8x6xf32> -> vector<8x6xf32>
    %c0_13 = arith.constant 0 : index
    %c0_14 = arith.constant 0 : index
    %13 = vector.load %arg7[%c0_13, %c0_14] : memref<1x6xf32, #tpu.memory_space<vmem>>, vector<1x6xf32>
    %14 = vector.broadcast %13 : vector<1x6xf32> to vector<8x6xf32>
    %15 = arith.addf %12, %14 : vector<8x6xf32>
    %c0_15 = arith.constant 0 : index
    %c0_16 = arith.constant 0 : index
    %16 = vector.load %arg8[%c0_15, %c0_16] : memref<8x64xf32, #tpu.memory_space<vmem>>, vector<8x64xf32>
    tpu.vector_store %arg8[%c0_15, %c0_16], %10 {strides = array<i32>} : memref<8x64xf32, #tpu.memory_space<vmem>>, vector<8x64xf32>,
    %c0_17 = arith.constant 0 : index
    %c0_18 = arith.constant 0 : index
    %17 = vector.load %arg9[%c0_17, %c0_18] : memref<8x6xf32, #tpu.memory_space<vmem>>, vector<8x6xf32>
    tpu.vector_store %arg9[%c0_17, %c0_18], %15 {strides = array<i32>} : memref<8x6xf32, #tpu.memory_space<vmem>>, vector<8x6xf32>,
    return
  }
  func.func @transform_0(%arg0: i32) -> (i32, i32) {
    %c0_i32 = arith.constant 0 : i32
    %c0_i32_0 = arith.constant 0 : i32
    return %arg0, %c0_i32 : i32, i32
  }
  func.func @transform_1(%arg0: i32) -> (i32, i32) {
    %c0_i32 = arith.constant 0 : i32
    %c0_i32_0 = arith.constant 0 : i32
    %c0_i32_1 = arith.constant 0 : i32
    return %c0_i32, %c0_i32_0 : i32, i32
  }
  func.func @transform_2(%arg0: i32) -> (i32, i32) {
    %c0_i32 = arith.constant 0 : i32
    %c0_i32_0 = arith.constant 0 : i32
    %c0_i32_1 = arith.constant 0 : i32
    return %c0_i32, %c0_i32_0 : i32, i32
  }
  func.func @transform_3(%arg0: i32) -> (i32, i32) {
    %c0_i32 = arith.constant 0 : i32
    %c0_i32_0 = arith.constant 0 : i32
    %c0_i32_1 = arith.constant 0 : i32
    return %c0_i32, %c0_i32_0 : i32, i32
  }
  func.func @transform_4(%arg0: i32) -> (i32, i32) {
    %c0_i32 = arith.constant 0 : i32
    %c0_i32_0 = arith.constant 0 : i32
    %c0_i32_1 = arith.constant 0 : i32
    return %c0_i32, %c0_i32_0 : i32, i32
  }
  func.func @transform_5(%arg0: i32) -> (i32, i32) {
    %c0_i32 = arith.constant 0 : i32
    %c0_i32_0 = arith.constant 0 : i32
    %c0_i32_1 = arith.constant 0 : i32
    return %c0_i32, %c0_i32_0 : i32, i32
  }
  func.func @transform_6(%arg0: i32) -> (i32, i32) {
    %c0_i32 = arith.constant 0 : i32
    %c0_i32_0 = arith.constant 0 : i32
    %c0_i32_1 = arith.constant 0 : i32
    return %c0_i32, %c0_i32_0 : i32, i32
  }
  func.func @transform_7(%arg0: i32) -> (i32, i32) {
    %c0_i32 = arith.constant 0 : i32
    %c0_i32_0 = arith.constant 0 : i32
    return %arg0, %c0_i32 : i32, i32
  }
  func.func @transform_8(%arg0: i32) -> (i32, i32) {
    %c0_i32 = arith.constant 0 : i32
    %c0_i32_0 = arith.constant 0 : i32
    return %arg0, %c0_i32 : i32, i32
  }
}

</mosaic_0001>

<llo_original>
// kernel: tpu_custom_call.1
$region0: #{tpu_custom_call.1}
  #allocation0 [shape = 'u32[]', space=smem, size = 0x4, offset = 0x4, fixed_abs, tag = 'smem constant byte address 0x4 - core index']
  #allocation1 [shape = 'u32[144,128]{1,0:T(1,128)}', space=vmem, size = 0x12000, scoped, tag = 'internal scratch']
  %s0 = inlined_call_operand.hbm [shape: f32[8,16], index: 0, kind: input, shape index: {}]
  %s1 = inlined_call_operand.vmem [shape: f32[16,32], index: 1, kind: input, shape index: {}]
  %s2 = inlined_call_operand.vmem [shape: f32[1,32], index: 2, kind: input, shape index: {}]
  %s3 = inlined_call_operand.vmem [shape: f32[32,64], index: 3, kind: input, shape index: {}]
  %s4 = inlined_call_operand.vmem [shape: f32[1,64], index: 4, kind: input, shape index: {}]
  %s5 = inlined_call_operand.vmem [shape: f32[32,6], index: 5, kind: input, shape index: {}]
  %s6 = inlined_call_operand.vmem [shape: f32[1,6], index: 6, kind: input, shape index: {}]
  %s7 = inlined_call_operand.hbm [shape: f32[8,64], index: 7, kind: output, shape index: {0}]
  %s8 = inlined_call_operand.hbm [shape: f32[8,6], index: 8, kind: output, shape index: {1}]
  %9 = xla_tuple %s7, %s8
  %s10 = sld [smem:[#allocation0]]
  $region50: #{tpu_custom_call.1} parent=0
    _
  %s12 = ssub.s32 1, %s10
  %s13 = scalar_select 0, %s12, %s10
  $region1: #{tpu_custom_call.1} parent=0
    #allocation2 [shape = 'u8[4096]{0}', space=vmem, size = 0x1000, scoped, tag = 'input window, operand 0, single buffered']
    #allocation3 [shape = 's32[1]{0}', space=sflag, size = 0x4, scoped, tag = 'scoped memory for tpu_custom_call.1']
    #allocation4 [shape = 's32[1]{0}', space=sflag, size = 0x4, scoped, tag = 'scoped memory for tpu_custom_call.1']
    #allocation5 [shape = 'u8[4096]{0}', space=vmem, size = 0x1000, scoped, tag = 'output window, operand 0, single buffered']
    #allocation6 [shape = 'u8[4096]{0}', space=vmem, size = 0x1000, scoped, tag = 'output window, operand 1, single buffered']
    #allocation7 [shape = 's32[1]{0}', space=sflag, size = 0x4, scoped, tag = 'scoped memory for tpu_custom_call.1']
    %14 = vsyncpa [#allocation3], 0
    %15 = vsyncpa [#allocation4], 0
    %16 = vsyncpa [#allocation7], 0
    // Predicated region
    $region2: #{tpu_custom_call.1} parent=1 // pred_check
      _
    $region3: #{tpu_custom_call.1} parent=1 // pred_check_branch
      %18 = sbr.rel (0) target = $region5
    $region4: #{tpu_custom_call.1} parent=1 // pred_region
      %s20 = ssub.s32 128, 128
      %21 = vsyncadd [#allocation3], %s20
      %s23 = sshll.u32 [#allocation2], 4
      %s24 = int_to_ptr.vmem [resolvable:$true] %s23
      %26 = dma.hbm_to_vmem [thread:$0]  %s0, 128, %s24, [#allocation3]
    $region5: #{tpu_custom_call.1} parent=1 // pred_fallthru
      _
    // Predicated region
    $region6: #{tpu_custom_call.1} parent=1 // pred_check
      _
    $region7: #{tpu_custom_call.1} parent=1 // pred_check_branch
      %28 = sbr.rel (0) target = $region9
    $region8: #{tpu_custom_call.1} parent=1 // pred_region
      _
    $region9: #{tpu_custom_call.1} parent=1 // pred_fallthru
      _
    // Predicated region
    $region10: #{tpu_custom_call.1} parent=1 // pred_check
      _
    $region11: #{tpu_custom_call.1} parent=1 // pred_check_branch
      %30 = sbr.rel (0) target = $region13
    $region12: #{tpu_custom_call.1} parent=1 // pred_region
      _
    $region13: #{tpu_custom_call.1} parent=1 // pred_fallthru
      _
    // Predicated region
    $region14: #{tpu_custom_call.1} parent=1 // pred_check
      _
    $region15: #{tpu_custom_call.1} parent=1 // pred_check_branch
      %32 = sbr.rel (0) target = $region17
    $region16: #{tpu_custom_call.1} parent=1 // pred_region
      _
    $region17: #{tpu_custom_call.1} parent=1 // pred_fallthru
      _
    // Predicated region
    $region18: #{tpu_custom_call.1} parent=1 // pred_check
      _
    $region19: #{tpu_custom_call.1} parent=1 // pred_check_branch
      %34 = sbr.rel (0) target = $region21
    $region20: #{tpu_custom_call.1} parent=1 // pred_region
      _
    $region21: #{tpu_custom_call.1} parent=1 // pred_fallthru
      _
    // Predicated region
    $region22: #{tpu_custom_call.1} parent=1 // pred_check
      _
    $region23: #{tpu_custom_call.1} parent=1 // pred_check_branch
      %36 = sbr.rel (0) target = $region25
    $region24: #{tpu_custom_call.1} parent=1 // pred_region
      _
    $region25: #{tpu_custom_call.1} parent=1 // pred_fallthru
      _
    // Predicated region
    $region26: #{tpu_custom_call.1} parent=1 // pred_check
      _
    $region27: #{tpu_custom_call.1} parent=1 // pred_check_branch
      %38 = sbr.rel (0) target = $region29
    $region28: #{tpu_custom_call.1} parent=1 // pred_region
      _
    $region29: #{tpu_custom_call.1} parent=1 // pred_fallthru
      _
    // Predicated region
    $region30: #{tpu_custom_call.1} parent=1 // pred_check
      _
    $region31: #{tpu_custom_call.1} parent=1 // pred_check_branch
      %40 = sbr.rel (0) target = $region33
    $region32: #{tpu_custom_call.1} parent=1 // pred_region
      %41 = dma.done [#allocation3], 128
    $region33: #{tpu_custom_call.1} parent=1 // pred_fallthru
      _
    %v42 = vld [vmem:[#allocation2] sm:$0xff]
    %v43 = vld [vmem:[%s1] sm:$0xff]
    %v44 = vld [vmem:[%s1 + $0x8] sm:$0xff]
    %v45 = vld [vmem:[%s2] sm:$0x1]
    %v47 = vlaneseq
    %v48 = vshrl.u32 %v47, 7
    %v49 = vsub.s32 0, %v48
    %v50 = vrot.slane %v45, %v49
    %vm52 = vcmask 130048
    %v54 = vsel %vm52, %v42, 0
    %56 = vmatprep.subr.mxu0 0.0
    %57 = vmatpush1.msra.mxu0 %v43
    %58 = vmatprep.subr.mxu0 0.0
    %59 = vmatpush1.msra.mxu0 %v44
    %60 = vmatprep.subr.mxu0 0.0
    %61 = vmatpush1.msra.mxu0 0.0
    %62 = vmatprep.subr.mxu0 0.0
    %63 = vmatpush1.msra.mxu0 0.0
    %64 = vmatprep.subr.mxu0 0.0
    %65 = vmatpush1.msra.mxu0 0.0
    %66 = vmatprep.subr.mxu0 0.0
    %67 = vmatpush1.msra.mxu0 0.0
    %68 = vmatprep.subr.mxu0 0.0
    %69 = vmatpush1.msra.mxu0 0.0
    %70 = vmatprep.subr.mxu0 0.0
    %71 = vmatpush1.msra.mxu0 0.0
    %72 = vmatprep.subr.mxu0 0.0
    %73 = vmatpush1.msra.mxu0 0.0
    %74 = vmatprep.subr.mxu0 0.0
    %75 = vmatpush1.msra.mxu0 0.0
    %76 = vmatprep.subr.mxu0 0.0
    %77 = vmatpush1.msra.mxu0 0.0
    %78 = vmatprep.subr.mxu0 0.0
    %79 = vmatpush1.msra.mxu0 0.0
    %80 = vmatprep.subr.mxu0 0.0
    %81 = vmatpush1.msra.mxu0 0.0
    %82 = vmatprep.subr.mxu0 0.0
    %83 = vmatpush1.msra.mxu0 0.0
    %84 = vmatprep.subr.mxu0 0.0
    %85 = vmatpush1.msra.mxu0 0.0
    %86 = vmatprep.subr.mxu0 0.0
    %87 = vmatpush1.msra.mxu0 0.0
    %88 = vmatprep.subr.mxu0 0.0
    %89 = vmatpush1.msra.mxu0 0.0
    %90 = vmatprep.subr.mxu0 0.0
    %91 = vmatpush1.msra.mxu0 0.0
    %92 = vmatprep.subr.mxu0 0.0
    %93 = vmatpush1.msra.mxu0 0.0
    %94 = vmatprep.subr.mxu0 0.0
    %95 = vmatpush1.msra.mxu0 0.0
    %96 = vmatprep.subr.mxu0 0.0
    %97 = vmatpush1.msra.mxu0 0.0
    %98 = vmatprep.subr.mxu0 0.0
    %99 = vmatpush1.msra.mxu0 0.0
    %100 = vmatprep.subr.mxu0 0.0
    %101 = vmatpush1.msra.mxu0 0.0
    %102 = vmatprep.subr.mxu0 0.0
    %103 = vmatpush1.msra.mxu0 0.0
    %104 = vmatprep.subr.mxu0 0.0
    %105 = vmatpush1.msra.mxu0 0.0
    %106 = vmatprep.subr.mxu0 0.0
    %107 = vmatpush1.msra.mxu0 0.0
    %108 = vmatprep.subr.mxu0 0.0
    %109 = vmatpush1.msra.mxu0 0.0
    %110 = vmatprep.subr.mxu0 0.0
    %111 = vmatpush1.msra.mxu0 0.0
    %112 = vmatprep.subr.mxu0 0.0
    %113 = vmatpush1.msra.mxu0 0.0
    %114 = vmatprep.subr.mxu0 0.0
    %115 = vmatpush1.msra.mxu0 0.0
    %116 = vmatprep.subr.mxu0 0.0
    %117 = vmatpush1.msra.mxu0 0.0
    %118 = vmatprep.subr.mxu0 0.0
    %119 = vmatpush1.msra.mxu0 0.0
    %120 = vmatprep.mubr.f32.mxu0 0.0
    %121 = vmatmul.mubr.f32.gmra.mrb[0].mxu0 %v54
    %v122 = vpop.f32.mrb[0].mxu0
    %v123 = vadd.f32 %v50, %v122
    %v124 = vpop.f32.mrb[0].mxu0
    %125 = vdwg.mxu0
    %v126 = vld [vmem:[%s3] sm:$0xff]
    %v127 = vld [vmem:[%s3 + $0x8] sm:$0xff]
    %v128 = vld [vmem:[%s3 + $0x10] sm:$0xff]
    %v129 = vld [vmem:[%s3 + $0x18] sm:$0xff]
    %v130 = vld [vmem:[%s4] sm:$0x1]
    %v132 = vlaneseq
    %v133 = vshrl.u32 %v132, 7
    %v134 = vsub.s32 0, %v133
    %v135 = vrot.slane %v130, %v134
    %vm137 = vcmask 261120
    %v139 = vsel %vm137, %v123, 0
    %141 = vmatprep.subr.mxu0 0.0
    %142 = vmatpush1.msra.mxu0 %v126
    %143 = vmatprep.subr.mxu0 0.0
    %144 = vmatpush1.msra.mxu0 %v127
    %145 = vmatprep.subr.mxu0 0.0
    %146 = vmatpush1.msra.mxu0 %v128
    %147 = vmatprep.subr.mxu0 0.0
    %148 = vmatpush1.msra.mxu0 %v129
    %149 = vmatprep.subr.mxu0 0.0
    %150 = vmatpush1.msra.mxu0 0.0
    %151 = vmatprep.subr.mxu0 0.0
    %152 = vmatpush1.msra.mxu0 0.0
    %153 = vmatprep.subr.mxu0 0.0
    %154 = vmatpush1.msra.mxu0 0.0
    %155 = vmatprep.subr.mxu0 0.0
    %156 = vmatpush1.msra.mxu0 0.0
    %157 = vmatprep.subr.mxu0 0.0
    %158 = vmatpush1.msra.mxu0 0.0
    %159 = vmatprep.subr.mxu0 0.0
    %160 = vmatpush1.msra.mxu0 0.0
    %161 = vmatprep.subr.mxu0 0.0
    %162 = vmatpush1.msra.mxu0 0.0
    %163 = vmatprep.subr.mxu0 0.0
    %164 = vmatpush1.msra.mxu0 0.0
    %165 = vmatprep.subr.mxu0 0.0
    %166 = vmatpush1.msra.mxu0 0.0
    %167 = vmatprep.subr.mxu0 0.0
    %168 = vmatpush1.msra.mxu0 0.0
    %169 = vmatprep.subr.mxu0 0.0
    %170 = vmatpush1.msra.mxu0 0.0
    %171 = vmatprep.subr.mxu0 0.0
    %172 = vmatpush1.msra.mxu0 0.0
    %173 = vmatprep.subr.mxu0 0.0
    %174 = vmatpush1.msra.mxu0 0.0
    %175 = vmatprep.subr.mxu0 0.0
    %176 = vmatpush1.msra.mxu0 0.0
    %177 = vmatprep.subr.mxu0 0.0
    %178 = vmatpush1.msra.mxu0 0.0
    %179 = vmatprep.subr.mxu0 0.0
    %180 = vmatpush1.msra.mxu0 0.0
    %181 = vmatprep.subr.mxu0 0.0
    %182 = vmatpush1.msra.mxu0 0.0
    %183 = vmatprep.subr.mxu0 0.0
    %184 = vmatpush1.msra.mxu0 0.0
    %185 = vmatprep.subr.mxu0 0.0
    %186 = vmatpush1.msra.mxu0 0.0
    %187 = vmatprep.subr.mxu0 0.0
    %188 = vmatpush1.msra.mxu0 0.0
    %189 = vmatprep.subr.mxu0 0.0
    %190 = vmatpush1.msra.mxu0 0.0
    %191 = vmatprep.subr.mxu0 0.0
    %192 = vmatpush1.msra.mxu0 0.0
    %193 = vmatprep.subr.mxu0 0.0
    %194 = vmatpush1.msra.mxu0 0.0
    %195 = vmatprep.subr.mxu0 0.0
    %196 = vmatpush1.msra.mxu0 0.0
    %197 = vmatprep.subr.mxu0 0.0
    %198 = vmatpush1.msra.mxu0 0.0
    %199 = vmatprep.subr.mxu0 0.0
    %200 = vmatpush1.msra.mxu0 0.0
    %201 = vmatprep.subr.mxu0 0.0
    %202 = vmatpush1.msra.mxu0 0.0
    %203 = vmatprep.subr.mxu0 0.0
    %204 = vmatpush1.msra.mxu0 0.0
    %205 = vmatprep.mubr.f32.mxu0 0.0
    %206 = vmatmul.mubr.f32.gmra.mrb[0].mxu0 %v139
    %v207 = vpop.f32.mrb[0].mxu0
    %v208 = vadd.f32 %v135, %v207
    %v209 = vpop.f32.mrb[0].mxu0
    %210 = vdwg.mxu0
    %v211 = vld [vmem:[%s5] sm:$0xff]
    %v212 = vld [vmem:[%s5 + $0x8] sm:$0xff]
    %v213 = vld [vmem:[%s5 + $0x10] sm:$0xff]
    %v214 = vld [vmem:[%s5 + $0x18] sm:$0xff]
    %v215 = vld [vmem:[%s6] sm:$0x1]
    %v217 = vlaneseq
    %v218 = vshrl.u32 %v217, 7
    %v219 = vsub.s32 0, %v218
    %v220 = vrot.slane %v215, %v219
    %222 = vmatprep.subr.mxu0 0.0
    %223 = vmatpush1.msra.mxu0 %v211
    %224 = vmatprep.subr.mxu0 0.0
    %225 = vmatpush1.msra.mxu0 %v212
    %226 = vmatprep.subr.mxu0 0.0
    %227 = vmatpush1.msra.mxu0 %v213
    %228 = vmatprep.subr.mxu0 0.0
    %229 = vmatpush1.msra.mxu0 %v214
    %230 = vmatprep.subr.mxu0 0.0
    %231 = vmatpush1.msra.mxu0 0.0
    %232 = vmatprep.subr.mxu0 0.0
    %233 = vmatpush1.msra.mxu0 0.0
    %234 = vmatprep.subr.mxu0 0.0
    %235 = vmatpush1.msra.mxu0 0.0
    %236 = vmatprep.subr.mxu0 0.0
    %237 = vmatpush1.msra.mxu0 0.0
    %238 = vmatprep.subr.mxu0 0.0
    %239 = vmatpush1.msra.mxu0 0.0
    %240 = vmatprep.subr.mxu0 0.0
    %241 = vmatpush1.msra.mxu0 0.0
    %242 = vmatprep.subr.mxu0 0.0
    %243 = vmatpush1.msra.mxu0 0.0
    %244 = vmatprep.subr.mxu0 0.0
    %245 = vmatpush1.msra.mxu0 0.0
    %246 = vmatprep.subr.mxu0 0.0
    %247 = vmatpush1.msra.mxu0 0.0
    %248 = vmatprep.subr.mxu0 0.0
    %249 = vmatpush1.msra.mxu0 0.0
    %250 = vmatprep.subr.mxu0 0.0
    %251 = vmatpush1.msra.mxu0 0.0
    %252 = vmatprep.subr.mxu0 0.0
    %253 = vmatpush1.msra.mxu0 0.0
    %254 = vmatprep.subr.mxu0 0.0
    %255 = vmatpush1.msra.mxu0 0.0
    %256 = vmatprep.subr.mxu0 0.0
    %257 = vmatpush1.msra.mxu0 0.0
    %258 = vmatprep.subr.mxu0 0.0
    %259 = vmatpush1.msra.mxu0 0.0
    %260 = vmatprep.subr.mxu0 0.0
    %261 = vmatpush1.msra.mxu0 0.0
    %262 = vmatprep.subr.mxu0 0.0
    %263 = vmatpush1.msra.mxu0 0.0
    %264 = vmatprep.subr.mxu0 0.0
    %265 = vmatpush1.msra.mxu0 0.0
    %266 = vmatprep.subr.mxu0 0.0
    %267 = vmatpush1.msra.mxu0 0.0
    %268 = vmatprep.subr.mxu0 0.0
    %269 = vmatpush1.msra.mxu0 0.0
    %270 = vmatprep.subr.mxu0 0.0
    %271 = vmatpush1.msra.mxu0 0.0
    %272 = vmatprep.subr.mxu0 0.0
    %273 = vmatpush1.msra.mxu0 0.0
    %274 = vmatprep.subr.mxu0 0.0
    %275 = vmatpush1.msra.mxu0 0.0
    %276 = vmatprep.subr.mxu0 0.0
    %277 = vmatpush1.msra.mxu0 0.0
    %278 = vmatprep.subr.mxu0 0.0
    %279 = vmatpush1.msra.mxu0 0.0
    %280 = vmatprep.subr.mxu0 0.0
    %281 = vmatpush1.msra.mxu0 0.0
    %282 = vmatprep.subr.mxu0 0.0
    %283 = vmatpush1.msra.mxu0 0.0
    %284 = vmatprep.subr.mxu0 0.0
    %285 = vmatpush1.msra.mxu0 0.0
    %286 = vmatprep.mubr.f32.mxu0 0.0
    %287 = vmatmul.mubr.f32.gmra.mrb[0].mxu0 %v139
    %v288 = vpop.f32.mrb[0].mxu0
    %v289 = vadd.f32 %v220, %v288
    %v290 = vpop.f32.mrb[0].mxu0
    %291 = vdwg.mxu0
    %vm292 = vcmask 523264
    %293 = vst.msk [vmem:[#allocation5] sm:$0xff] %vm292, %v208
    %vm294 = vcmask 48128
    %295 = vst.msk [vmem:[#allocation6] sm:$0xff] %vm294, %v289
    // Predicated region
    $region34: #{tpu_custom_call.1} parent=1 // pred_check
      _
    $region35: #{tpu_custom_call.1} parent=1 // pred_check_branch
      %297 = sbr.rel (0) target = $region37
    $region36: #{tpu_custom_call.1} parent=1 // pred_region
      %s299 = ssub.s32 128, 128
      %300 = vsyncadd [#allocation4], %s299
      %s302 = sshll.u32 [#allocation5], 4
      %s303 = int_to_ptr.vmem [resolvable:$true] %s302
      %305 = dma.vmem_to_hbm [thread:$0]  %s303, 128, %s7, [#allocation4]
    $region37: #{tpu_custom_call.1} parent=1 // pred_fallthru
      _
    // Predicated region
    $region38: #{tpu_custom_call.1} parent=1 // pred_check
      _
    $region39: #{tpu_custom_call.1} parent=1 // pred_check_branch
      %307 = sbr.rel (0) target = $region41
    $region40: #{tpu_custom_call.1} parent=1 // pred_region
      %s309 = ssub.s32 128, 128
      %310 = vsyncadd [#allocation7], %s309
      %s312 = sshll.u32 [#allocation6], 4
      %s313 = int_to_ptr.vmem [resolvable:$true] %s312
      %315 = dma.vmem_to_hbm [thread:$0]  %s313, 128, %s8, [#allocation7]
    $region41: #{tpu_custom_call.1} parent=1 // pred_fallthru
      _
    // Predicated region
    $region42: #{tpu_custom_call.1} parent=1 // pred_check
      _
    $region43: #{tpu_custom_call.1} parent=1 // pred_check_branch
      %317 = sbr.rel (0) target = $region45
    $region44: #{tpu_custom_call.1} parent=1 // pred_region
      %318 = dma.done [#allocation4], 128
    $region45: #{tpu_custom_call.1} parent=1 // pred_fallthru
      _
    // Predicated region
    $region46: #{tpu_custom_call.1} parent=1 // pred_check
      _
    $region47: #{tpu_custom_call.1} parent=1 // pred_check_branch
      %320 = sbr.rel (0) target = $region49
    $region48: #{tpu_custom_call.1} parent=1 // pred_region
      %321 = dma.done [#allocation7], 128
    $region49: #{tpu_custom_call.1} parent=1 // pred_fallthru
      _
    %322 = vsyncpa [#allocation3], 1
    %323 = vsyncpa [#allocation4], 1
    %324 = vsyncpa [#allocation7], 1

</llo_original>
